<compile_context>
chip_gen: v6e
topology: v6e:2x2x1
jax: 0.10.0
libtpu: 0.0.40
codegen_flags: <defaults>
</compile_context>

<pallas_src>
import math
import random

import jax
import jax.numpy as jnp
from jax import lax
from jax.experimental import pallas as pl
from jax.experimental.pallas import tpu as pltpu

VMEM = pltpu.MemorySpace.VMEM
SMEM = pltpu.MemorySpace.SMEM


# ------------------------------------------------------------------ kernel
def _make_fused_kernel(num_heads, num_classes, apply_adapter, contrastive):
    H, C = num_heads, num_classes
    HC = H * C
    ignore_index = C

    def kernel(*refs):
        refs = list(refs)
        labels_ref = refs.pop(0)                        # (B, H) i32 VMEM
        x_ref = refs.pop(0)                             # (B, D) f32 VMEM
        w_heads_ref = refs.pop(0)                       # (D, H*C)
        b_heads_ref = refs.pop(0)                       # (1, H*C)
        seg_ref = refs.pop(0)                           # (H*C, H) segment indicator
        seg_t_ref = refs.pop(0)                         # (H, H*C) its transpose
        within_ref = refs.pop(0)                        # (1, H*C) col index within head
        if contrastive and apply_adapter:
            w_adp_ref = refs.pop(0)                     # (D, D)  folded adapter
            b_adp_ref = refs.pop(0)                     # (1, D)
        if contrastive:
            txt_ref = refs.pop(0)                       # (B, D)
            exp_scale_ref = refs.pop(0)                 # (1,) f32 SMEM (exp(logit_scale))
        loss_ref = refs.pop(0)                          # (1, H+2) f32 SMEM (output)

        x = x_ref[...]
        labels = labels_ref[...]

        # Classifier heads directly from raw x (adapter pre-folded into w_heads).
        logits = jnp.dot(x, w_heads_ref[...],
                         preferred_element_type=jnp.float32) + b_heads_ref[...]   # (B, HC)

        # Expand labels across head columns with a tiny independent MXU dot.
        labels_f = labels.astype(jnp.float32)                                     # (B, H)
        lab_exp = jnp.dot(labels_f, seg_t_ref[...],
                          preferred_element_type=jnp.float32)                     # (B, HC)
        onehot = within_ref[...] == lab_exp          # label==ignore never matches (B, HC)

        # Vectorized per-head cross-entropy (single LSE shift + segment sums by matmul).
        gmax = jnp.max(logits, axis=-1, keepdims=True)                            # (B, 1)
        e = jnp.exp(logits - gmax)                                                # (B, HC)
        seg = seg_ref[...]                                                        # (HC, H)
        exp_sums = jnp.dot(e, seg, preferred_element_type=jnp.float32)            # (B, H)
        lse = gmax + jnp.log(exp_sums)                                            # (B, H)
        picked = jnp.dot(jnp.where(onehot, logits, 0.0), seg,
                         preferred_element_type=jnp.float32)                      # (B, H)

        valid = labels != ignore_index                                            # (B, H)
        valid_f = valid.astype(jnp.float32)
        per_row = jnp.where(valid, lse - picked, 0.0)                             # (B, H)
        sum_loss = jnp.sum(per_row, axis=0, keepdims=True)                        # (1, H)
        cnt = jnp.sum(valid_f, axis=0, keepdims=True)                             # (1, H)
        # in-kernel NaN guard: all-ignored head -> loss 0.0
        head_losses = jnp.where(cnt > 0.0, sum_loss / jnp.maximum(cnt, 1.0), 0.0)
        total = jnp.sum(head_losses)

        closs = jnp.float32(0.0)
        if contrastive:
            if apply_adapter:
                # adapter dot only feeds the contrastive branch; independent of heads dot
                xa = jnp.dot(x, w_adp_ref[...],
                             preferred_element_type=jnp.float32) + b_adp_ref[...]
            else:
                xa = x
            txt = txt_ref[...]
            img_n = xa * lax.rsqrt(jnp.sum(xa * xa, axis=-1, keepdims=True))
            txt_n = txt * lax.rsqrt(jnp.sum(txt * txt, axis=-1, keepdims=True))
            sims = lax.dot_general(img_n, txt_n, (((1,), (1,)), ((), ())),
                                   preferred_element_type=jnp.float32)            # (B, B)
            sims = sims * exp_scale_ref[0]
            Bb = sims.shape[0]
            row_i = lax.broadcasted_iota(jnp.int32, sims.shape, 0)
            col_i = lax.broadcasted_iota(jnp.int32, sims.shape, 1)
            # diagonal computed once, reused for both CE directions
            diag = jnp.sum(jnp.where(row_i == col_i, sims, 0.0),
                           axis=1, keepdims=True)                                 # (B, 1)
            m_r = jnp.max(sims, axis=1, keepdims=True)
            lse_r = m_r + jnp.log(jnp.sum(jnp.exp(sims - m_r), axis=1, keepdims=True))
            m_c = jnp.max(sims, axis=0, keepdims=True)
            lse_c = m_c + jnp.log(jnp.sum(jnp.exp(sims - m_c), axis=0, keepdims=True))
            if Bb > ignore_index:
                # torch CE ignore_index applied to arange targets (only matters if B > C)
                valid_r = lax.broadcasted_iota(jnp.int32, (Bb, 1), 0) != ignore_index
                valid_c = lax.broadcasted_iota(jnp.int32, (1, Bb), 1) != ignore_index
                cnt_v = jnp.sum(valid_r.astype(jnp.float32))
                denom = jnp.maximum(cnt_v, 1.0)
                diag_valid = jnp.sum(jnp.where(valid_r, diag, 0.0))
                i_loss = (jnp.sum(jnp.where(valid_r, lse_r, 0.0)) - diag_valid) / denom
                t_loss = (jnp.sum(jnp.where(valid_c, lse_c, 0.0)) - diag_valid) / denom
                closs = jnp.where(cnt_v > 0.0, i_loss + t_loss, 0.0)
            else:
                inv_b = jnp.float32(1.0 / Bb)
                dsum = jnp.sum(diag)
                closs = (jnp.sum(lse_r) - dsum) * inv_b + (jnp.sum(lse_c) - dsum) * inv_b
            total = total + 0.5 * closs

        for h in range(H):
            loss_ref[0, h] = jnp.sum(head_losses[:, h:h + 1])
        loss_ref[0, H] = closs
        loss_ref[0, H + 1] = total

    return kernel


def fused_forward(labels, x, w_heads, b_heads, seg, seg_t, within,
                  w_adp=None, b_adp=None, txt=None, exp_scale=None, *,
                  num_heads, num_classes, apply_adapter, contrastive):
    kern = _make_fused_kernel(num_heads, num_classes, apply_adapter, contrastive)

    args = [labels, x, w_heads, b_heads, seg, seg_t, within]
    specs = [pl.BlockSpec(memory_space=VMEM)] * 7
    if contrastive and apply_adapter:
        args += [w_adp, b_adp]
        specs += [pl.BlockSpec(memory_space=VMEM)] * 2
    if contrastive:
        args += [txt, exp_scale]
        specs += [pl.BlockSpec(memory_space=VMEM), pl.BlockSpec(memory_space=SMEM)]

    return pl.pallas_call(
        kern,
        out_shape=jax.ShapeDtypeStruct((1, num_heads + 2), jnp.float32),
        in_specs=specs,
        out_specs=pl.BlockSpec(memory_space=SMEM),
    )(*args)


# ---------------------------------------------------------------- module
class ClassificationAdapterPallas:
    def __init__(self, input_dim, initial_residual_ratio, classifiers_names,
                 classifiers_outputs, logit_scale, contrastive=False,
                 identity=False, key=None):
        key = jax.random.PRNGKey(0) if key is None else key
        self.input_dim = input_dim
        self.classifiers_outputs = classifiers_outputs
        self.classifier_names = list(classifiers_names)
        self.num_heads = len(self.classifier_names)
        self.contrastive = contrastive
        self.identity = identity
        self.residual_ratio = float(initial_residual_ratio)
        self.logit_scale = jnp.asarray([logit_scale], dtype=jnp.float32)
        self.exp_logit_scale = jnp.exp(self.logit_scale)        # parameter: fold exp on host

        def linear_init(k, fan_in, fan_out):
            kw, kb = jax.random.split(k)
            bound = 1.0 / (fan_in ** 0.5)
            w = jax.random.uniform(kw, (fan_in, fan_out), jnp.float32, -bound, bound)
            b = jax.random.uniform(kb, (1, fan_out), jnp.float32, -bound, bound)
            return w, b

        key, ka = jax.random.split(key)
        self.adapter_w, self.adapter_b = linear_init(ka, input_dim, input_dim)

        ws, bs = [], []
        for _ in self.classifier_names:
            key, kc = jax.random.split(key)
            w, b = linear_init(kc, input_dim, classifiers_outputs)
            ws.append(w)
            bs.append(b)
        self.w_cat = jnp.concatenate(ws, axis=1)                 # (D, H*C)
        self.b_cat = jnp.concatenate(bs, axis=1)                 # (1, H*C)

        # ---- cached host-side folds (done ONCE at init, per perf review) ----
        if identity:
            self.w_fold = None
            self.b_fold = None
            self.w_heads = self.w_cat
            self.b_heads = self.b_cat
        else:
            r = self.residual_ratio
            eye = jnp.eye(input_dim, dtype=jnp.float32)
            self.w_fold = r * eye + (1.0 - r) * self.adapter_w   # residual folded
            self.b_fold = (1.0 - r) * self.adapter_b
            # fold the adapter into the classifier heads -> heads dot uses raw x
            self.w_heads = self.w_fold @ self.w_cat              # (D, H*C)
            self.b_heads = self.b_fold @ self.w_cat + self.b_cat  # (1, H*C)

        H, C = self.num_heads, classifiers_outputs
        head_of_col = jnp.repeat(jnp.arange(H), C)
        self.seg = (head_of_col[:, None] == jnp.arange(H)[None, :]).astype(jnp.float32)  # (HC,H)
        self.seg_t = jnp.transpose(self.seg)                                             # (H,HC)
        self.within = jnp.tile(jnp.arange(C, dtype=jnp.float32), H).reshape(1, H * C)    # (1,HC)

        # jit the whole forward (reshape, label stack, caption pick, pallas_call)
        if contrastive:
            self._jit_fwd = jax.jit(self._forward_contrastive)
        else:
            self._jit_fwd = jax.jit(self._forward_plain)

    # ---- jitted bodies (weights/flags closed over as constants) ----
    def _forward_plain(self, img, labels_tuple):
        x = img.astype(jnp.float32).reshape(img.shape[0], self.input_dim)
        labels = jnp.stack([l.astype(jnp.int32) for l in labels_tuple], axis=1)
        return fused_forward(labels, x, self.w_heads, self.b_heads,
                             self.seg, self.seg_t, self.within,
                             num_heads=self.num_heads,
                             num_classes=self.classifiers_outputs,
                             apply_adapter=not self.identity,
                             contrastive=False)

    def _forward_contrastive(self, img, labels_tuple, text_embeddings, c_idx):
        x = img.astype(jnp.float32).reshape(img.shape[0], self.input_dim)
        labels = jnp.stack([l.astype(jnp.int32) for l in labels_tuple], axis=1)
        te = text_embeddings.astype(jnp.float32).reshape(
            text_embeddings.shape[0], -1, self.input_dim)        # (B, P, D)
        # traced caption pick (no recompile per index)
        txt = lax.dynamic_index_in_dim(te, c_idx, axis=1, keepdims=False)   # (B, D)
        return fused_forward(labels, x, self.w_heads, self.b_heads,
                             self.seg, self.seg_t, self.within,
                             w_adp=self.w_fold, b_adp=self.b_fold,
                             txt=txt, exp_scale=self.exp_logit_scale,
                             num_heads=self.num_heads,
                             num_classes=self.classifiers_outputs,
                             apply_adapter=not self.identity,
                             contrastive=True)

    def forward(self, batch):
        img = batch["image_embeddings"]
        labels_tuple = tuple(batch["labels"][n] for n in self.classifier_names)
        if self.contrastive:
            te = batch["text_embeddings"]
            n_captions = math.prod(te.shape[1:-1])               # (B, P, D) after squeeze
            c = random.randint(0, n_captions - 1)                # host RNG (torch parity)
            losses = self._jit_fwd(img, labels_tuple, te,
                                   jnp.asarray(c, dtype=jnp.int32))
        else:
            losses = self._jit_fwd(img, labels_tuple)

        loss_obj = {name: losses[0, i]
                    for i, name in enumerate(self.classifier_names)}
        loss_obj["loss"] = losses[0, -1]
        return loss_obj


# ---------------------------------------------------------------- reference
def _ref_forward(model, batch, c_idx):
    """Pure-JAX reference using the ORIGINAL (un-folded) parameters."""
    x = jnp.asarray(batch["image_embeddings"], jnp.float32).reshape(-1, model.input_dim)
    if not model.identity:
        r = model.residual_ratio
        x = r * x + (1.0 - r) * (x @ model.adapter_w + model.adapter_b)
    ig = model.classifiers_outputs
    C = model.classifiers_outputs

    def ce(logits, labels):
        lse = jax.nn.logsumexp(logits, axis=-1)
        picked = jnp.take_along_axis(
            logits, jnp.clip(labels, 0, logits.shape[-1] - 1)[:, None], axis=-1)[:, 0]
        valid = labels != ig
        cnt = jnp.sum(valid).astype(jnp.float32)
        return jnp.where(cnt > 0,
                         jnp.sum(jnp.where(valid, lse - picked, 0.0))
                         / jnp.maximum(cnt, 1.0),
                         0.0)

    out = {}
    acc = 0.0
    for i, name in enumerate(model.classifier_names):
        w = model.w_cat[:, i * C:(i + 1) * C]
        b = model.b_cat[:, i * C:(i + 1) * C]
        hl = ce(x @ w + b, jnp.asarray(batch["labels"][name], jnp.int32))
        out[name] = hl
        acc = acc + hl
    if model.contrastive:
        t = jnp.asarray(batch["text_embeddings"], jnp.float32).reshape(
            x.shape[0], -1, model.input_dim)[:, c_idx, :]
        t = t / jnp.linalg.norm(t, axis=-1, keepdims=True)
        xn = x / jnp.linalg.norm(x, axis=-1, keepdims=True)
        logits = xn @ t.T * jnp.exp(model.logit_scale[0])
        tgt = jnp.arange(logits.shape[0], dtype=jnp.int32)
        acc = acc + (ce(logits, tgt) + ce(logits.T, tgt)) / 2.0
    out["loss"] = acc
    return out


# ---------------------------------------------------------------- main
if __name__ == "__main__":
    random.seed(0)
    key = jax.random.PRNGKey(0)
    B, D, C, P = 8, 32, 8, 3   # batch, embed dim, classes, captions per image

    k1, k2, k3, k4, kp = jax.random.split(key, 5)
    image_embeddings = jax.random.normal(k1, (B, 1, D), jnp.float32)
    text_embeddings = jax.random.normal(k2, (B, 1, P, D), jnp.float32)
    labels_a = jax.random.randint(k3, (B,), 0, C).astype(jnp.int32)
    labels_b = jax.random.randint(k4, (B,), 0, C).astype(jnp.int32)
    labels_b = labels_b.at[0].set(C)   # one ignored label (ignore_index == C)

    batch = {
        "image_embeddings": image_embeddings,
        "text_embeddings": text_embeddings,
        "labels": {"pathology": labels_a, "modality": labels_b},
    }

    model = ClassificationAdapterPallas(
        input_dim=D,
        initial_residual_ratio=0.5,
        classifiers_names=["pathology", "modality"],
        classifiers_outputs=C,
        logit_scale=float(jnp.log(1.0 / 0.07)),
        contrastive=True,
        key=kp,
    )

    random.seed(0)                       # determinise the caption pick
    c_idx = random.randint(0, P - 1)
    random.seed(0)
    loss_obj = model.forward(batch)
    total = jax.block_until_ready(loss_obj["loss"])

    ref = _ref_forward(model, batch, c_idx)
    assert bool(jnp.isfinite(total)), "loss is not finite"
    for name in model.classifier_names:
        assert jnp.allclose(loss_obj[name], ref[name], rtol=1e-4, atol=1e-4), (
            f"head {name}: pallas={loss_obj[name]} ref={ref[name]}")
    assert jnp.allclose(total, ref["loss"], rtol=1e-4, atol=1e-4), (
        f"pallas={total} ref={ref['loss']}")

    print("KERNEL_OK")
</pallas_src>

<mosaic_0001>
module attributes {stable_mosaic.version = 11 : i64} {
  func.func @kernel(%arg0: memref<8x2xi32, #tpu.memory_space<vmem>>, %arg1: memref<8x32xf32, #tpu.memory_space<vmem>>, %arg2: memref<32x16xf32, #tpu.memory_space<vmem>>, %arg3: memref<1x16xf32, #tpu.memory_space<vmem>>, %arg4: memref<16x2xf32, #tpu.memory_space<vmem>>, %arg5: memref<2x16xf32, #tpu.memory_space<vmem>>, %arg6: memref<1x16xf32, #tpu.memory_space<vmem>>, %arg7: memref<32x32xf32, #tpu.memory_space<vmem>>, %arg8: memref<1x32xf32, #tpu.memory_space<vmem>>, %arg9: memref<8x32xf32, #tpu.memory_space<vmem>>, %arg10: memref<1xf32, #tpu.memory_space<smem>>, %arg11: memref<1x4xf32, #tpu.memory_space<smem>>) attributes {dimension_semantics = [], scalar_prefetch = 0 : i64, scratch_operands = 0 : i64, tpu.core_type = #tpu.core_type<tc>} {
    %c0 = arith.constant 0 : index
    %c0_0 = arith.constant 0 : index
    %0 = vector.load %arg1[%c0, %c0_0] : memref<8x32xf32, #tpu.memory_space<vmem>>, vector<8x32xf32>
    %c0_1 = arith.constant 0 : index
    %c0_2 = arith.constant 0 : index
    %1 = vector.load %arg0[%c0_1, %c0_2] : memref<8x2xi32, #tpu.memory_space<vmem>>, vector<8x2xi32>
    %c0_3 = arith.constant 0 : index
    %c0_4 = arith.constant 0 : index
    %2 = vector.load %arg2[%c0_3, %c0_4] : memref<32x16xf32, #tpu.memory_space<vmem>>, vector<32x16xf32>
    %cst = arith.constant dense<0.000000e+00> : vector<8x16xf32>
    %3 = tpu.matmul %0, %2, %cst {dimension_numbers = #tpu.dot_dimension_numbers<[1], [0], [0], [1], [0, 0, 1, 1], [], []>} : vector<8x32xf32>, vector<32x16xf32>, vector<8x16xf32> -> vector<8x16xf32>
    %c0_5 = arith.constant 0 : index
    %c0_6 = arith.constant 0 : index
    %4 = vector.load %arg3[%c0_5, %c0_6] : memref<1x16xf32, #tpu.memory_space<vmem>>, vector<1x16xf32>
    %5 = vector.broadcast %4 : vector<1x16xf32> to vector<8x16xf32>
    %6 = arith.addf %3, %5 : vector<8x16xf32>
    %7 = arith.sitofp %1 : vector<8x2xi32> to vector<8x2xf32>
    %c0_7 = arith.constant 0 : index
    %c0_8 = arith.constant 0 : index
    %8 = vector.load %arg5[%c0_7, %c0_8] : memref<2x16xf32, #tpu.memory_space<vmem>>, vector<2x16xf32>
    %cst_9 = arith.constant dense<0.000000e+00> : vector<8x16xf32>
    %9 = tpu.matmul %7, %8, %cst_9 {dimension_numbers = #tpu.dot_dimension_numbers<[1], [0], [0], [1], [0, 0, 1, 1], [], []>} : vector<8x2xf32>, vector<2x16xf32>, vector<8x16xf32> -> vector<8x16xf32>
    %c0_10 = arith.constant 0 : index
    %c0_11 = arith.constant 0 : index
    %10 = vector.load %arg6[%c0_10, %c0_11] : memref<1x16xf32, #tpu.memory_space<vmem>>, vector<1x16xf32>
    %11 = vector.broadcast %10 : vector<1x16xf32> to vector<8x16xf32>
    %12 = arith.cmpf oeq, %11, %9 : vector<8x16xf32>
    %cst_12 = arith.constant dense<0xFF800000> : vector<8xf32>
    %13 = vector.multi_reduction <maximumf>, %6, %cst_12 [1] : vector<8x16xf32> to vector<8xf32>
    %14 = vector.shape_cast %13 : vector<8xf32> to vector<8x1xf32>
    %15 = vector.broadcast %14 : vector<8x1xf32> to vector<8x16xf32>
    %16 = arith.subf %6, %15 : vector<8x16xf32>
    %17 = math.exp %16 : vector<8x16xf32>
    %c0_13 = arith.constant 0 : index
    %c0_14 = arith.constant 0 : index
    %18 = vector.load %arg4[%c0_13, %c0_14] : memref<16x2xf32, #tpu.memory_space<vmem>>, vector<16x2xf32>
    %cst_15 = arith.constant dense<0.000000e+00> : vector<8x2xf32>
    %19 = tpu.matmul %17, %18, %cst_15 {dimension_numbers = #tpu.dot_dimension_numbers<[1], [0], [0], [1], [0, 0, 1, 1], [], []>} : vector<8x16xf32>, vector<16x2xf32>, vector<8x2xf32> -> vector<8x2xf32>
    %20 = math.log %19 : vector<8x2xf32>
    %21 = vector.broadcast %14 : vector<8x1xf32> to vector<8x2xf32>
    %22 = arith.addf %21, %20 : vector<8x2xf32>
    %cst_16 = arith.constant 0.000000e+00 : f32
    %23 = vector.broadcast %cst_16 : f32 to vector<8x16xf32>
    %24 = arith.select %12, %6, %23 : vector<8x16xi1>, vector<8x16xf32>
    %cst_17 = arith.constant dense<0.000000e+00> : vector<8x2xf32>
    %25 = tpu.matmul %24, %18, %cst_17 {dimension_numbers = #tpu.dot_dimension_numbers<[1], [0], [0], [1], [0, 0, 1, 1], [], []>} : vector<8x16xf32>, vector<16x2xf32>, vector<8x2xf32> -> vector<8x2xf32>
    %c8_i32 = arith.constant 8 : i32
    %26 = vector.broadcast %c8_i32 : i32 to vector<8x2xi32>
    %27 = arith.cmpi ne, %1, %26 : vector<8x2xi32>
    %28 = arith.extui %27 : vector<8x2xi1> to vector<8x2xi32>
    %29 = arith.sitofp %28 : vector<8x2xi32> to vector<8x2xf32>
    %30 = arith.subf %22, %25 : vector<8x2xf32>
    %cst_18 = arith.constant 0.000000e+00 : f32
    %31 = vector.broadcast %cst_18 : f32 to vector<8x2xf32>
    %32 = arith.select %27, %30, %31 : vector<8x2xi1>, vector<8x2xf32>
    %cst_19 = arith.constant dense<0.000000e+00> : vector<2xf32>
    %33 = vector.multi_reduction <add>, %32, %cst_19 [0] : vector<8x2xf32> to vector<2xf32>
    %34 = vector.shape_cast %33 : vector<2xf32> to vector<1x2xf32>
    %cst_20 = arith.constant dense<0.000000e+00> : vector<2xf32>
    %35 = vector.multi_reduction <add>, %29, %cst_20 [0] : vector<8x2xf32> to vector<2xf32>
    %36 = vector.shape_cast %35 : vector<2xf32> to vector<1x2xf32>
    %cst_21 = arith.constant 0.000000e+00 : f32
    %37 = vector.broadcast %cst_21 : f32 to vector<1x2xf32>
    %38 = arith.cmpf ogt, %36, %37 : vector<1x2xf32>
    %cst_22 = arith.constant 1.000000e+00 : f32
    %39 = vector.broadcast %cst_22 : f32 to vector<1x2xf32>
    %40 = arith.maximumf %36, %39 : vector<1x2xf32>
    %41 = arith.divf %34, %40 : vector<1x2xf32>
    %cst_23 = arith.constant 0.000000e+00 : f32
    %42 = vector.broadcast %cst_23 : f32 to vector<1x2xf32>
    %43 = arith.select %38, %41, %42 : vector<1x2xi1>, vector<1x2xf32>
    %44 = vector.shape_cast %43 : vector<1x2xf32> to vector<1x1x2xf32>
    %cst_24 = arith.constant dense<0.000000e+00> : vector<1xf32>
    %45 = vector.multi_reduction <add>, %44, %cst_24 [1, 2] : vector<1x1x2xf32> to vector<1xf32>
    %46 = vector.shape_cast %45 : vector<1xf32> to vector<1x1x1xf32>
    %47 = vector.extract %46[0, 0, 0] : f32 from vector<1x1x1xf32>
    %c0_25 = arith.constant 0 : index
    %c0_26 = arith.constant 0 : index
    %48 = vector.load %arg7[%c0_25, %c0_26] : memref<32x32xf32, #tpu.memory_space<vmem>>, vector<32x32xf32>
    %cst_27 = arith.constant dense<0.000000e+00> : vector<8x32xf32>
    %49 = tpu.matmul %0, %48, %cst_27 {dimension_numbers = #tpu.dot_dimension_numbers<[1], [0], [0], [1], [0, 0, 1, 1], [], []>} : vector<8x32xf32>, vector<32x32xf32>, vector<8x32xf32> -> vector<8x32xf32>
    %c0_28 = arith.constant 0 : index
    %c0_29 = arith.constant 0 : index
    %50 = vector.load %arg8[%c0_28, %c0_29] : memref<1x32xf32, #tpu.memory_space<vmem>>, vector<1x32xf32>
    %51 = vector.broadcast %50 : vector<1x32xf32> to vector<8x32xf32>
    %52 = arith.addf %49, %51 : vector<8x32xf32>
    %c0_30 = arith.constant 0 : index
    %c0_31 = arith.constant 0 : index
    %53 = vector.load %arg9[%c0_30, %c0_31] : memref<8x32xf32, #tpu.memory_space<vmem>>, vector<8x32xf32>
    %54 = arith.mulf %52, %52 : vector<8x32xf32>
    %cst_32 = arith.constant dense<0.000000e+00> : vector<8xf32>
    %55 = vector.multi_reduction <add>, %54, %cst_32 [1] : vector<8x32xf32> to vector<8xf32>
    %56 = vector.shape_cast %55 : vector<8xf32> to vector<8x1xf32>
    %57 = math.rsqrt %56 : vector<8x1xf32>
    %58 = vector.broadcast %57 : vector<8x1xf32> to vector<8x32xf32>
    %59 = arith.mulf %52, %58 : vector<8x32xf32>
    %60 = arith.mulf %53, %53 : vector<8x32xf32>
    %cst_33 = arith.constant dense<0.000000e+00> : vector<8xf32>
    %61 = vector.multi_reduction <add>, %60, %cst_33 [1] : vector<8x32xf32> to vector<8xf32>
    %62 = vector.shape_cast %61 : vector<8xf32> to vector<8x1xf32>
    %63 = math.rsqrt %62 : vector<8x1xf32>
    %64 = vector.broadcast %63 : vector<8x1xf32> to vector<8x32xf32>
    %65 = arith.mulf %53, %64 : vector<8x32xf32>
    %cst_34 = arith.constant dense<0.000000e+00> : vector<8x8xf32>
    %66 = tpu.matmul %59, %65, %cst_34 {dimension_numbers = #tpu.dot_dimension_numbers<[1], [1], [0], [0], [0, 0, 1, 0], [], []>} : vector<8x32xf32>, vector<8x32xf32>, vector<8x8xf32> -> vector<8x8xf32>
    %c0_35 = arith.constant 0 : index
    %67 = memref.load %arg10[%c0_35] : memref<1xf32, #tpu.memory_space<smem>>
    %68 = vector.broadcast %67 : f32 to vector<8x8xf32>
    %69 = arith.mulf %66, %68 : vector<8x8xf32>
    %70 = tpu.iota {dimensions = array<i32: 0>} : vector<8x8xi32>
    %71 = tpu.iota {dimensions = array<i32: 1>} : vector<8x8xi32>
    %72 = arith.cmpi eq, %70, %71 : vector<8x8xi32>
    %cst_36 = arith.constant 0.000000e+00 : f32
    %73 = vector.broadcast %cst_36 : f32 to vector<8x8xf32>
    %74 = arith.select %72, %69, %73 : vector<8x8xi1>, vector<8x8xf32>
    %cst_37 = arith.constant dense<0.000000e+00> : vector<8xf32>
    %75 = vector.multi_reduction <add>, %74, %cst_37 [1] : vector<8x8xf32> to vector<8xf32>
    %76 = vector.shape_cast %75 : vector<8xf32> to vector<8x1xf32>
    %cst_38 = arith.constant dense<0xFF800000> : vector<8xf32>
    %77 = vector.multi_reduction <maximumf>, %69, %cst_38 [1] : vector<8x8xf32> to vector<8xf32>
    %78 = vector.shape_cast %77 : vector<8xf32> to vector<8x1xf32>
    %79 = vector.broadcast %78 : vector<8x1xf32> to vector<8x8xf32>
    %80 = arith.subf %69, %79 : vector<8x8xf32>
    %81 = math.exp %80 : vector<8x8xf32>
    %cst_39 = arith.constant dense<0.000000e+00> : vector<8xf32>
    %82 = vector.multi_reduction <add>, %81, %cst_39 [1] : vector<8x8xf32> to vector<8xf32>
    %83 = vector.shape_cast %82 : vector<8xf32> to vector<8x1xf32>
    %84 = math.log %83 : vector<8x1xf32>
    %85 = arith.addf %78, %84 : vector<8x1xf32>
    %cst_40 = arith.constant dense<0xFF800000> : vector<8xf32>
    %86 = vector.multi_reduction <maximumf>, %69, %cst_40 [0] : vector<8x8xf32> to vector<8xf32>
    %87 = vector.shape_cast %86 : vector<8xf32> to vector<1x8xf32>
    %88 = vector.broadcast %87 : vector<1x8xf32> to vector<8x8xf32>
    %89 = arith.subf %69, %88 : vector<8x8xf32>
    %90 = math.exp %89 : vector<8x8xf32>
    %cst_41 = arith.constant dense<0.000000e+00> : vector<8xf32>
    %91 = vector.multi_reduction <add>, %90, %cst_41 [0] : vector<8x8xf32> to vector<8xf32>
    %92 = vector.shape_cast %91 : vector<8xf32> to vector<1x8xf32>
    %93 = math.log %92 : vector<1x8xf32>
    %94 = arith.addf %87, %93 : vector<1x8xf32>
    %95 = vector.shape_cast %76 : vector<8x1xf32> to vector<1x8x1xf32>
    %cst_42 = arith.constant dense<0.000000e+00> : vector<1xf32>
    %96 = vector.multi_reduction <add>, %95, %cst_42 [1, 2] : vector<1x8x1xf32> to vector<1xf32>
    %97 = vector.shape_cast %96 : vector<1xf32> to vector<1x1x1xf32>
    %98 = vector.extract %97[0, 0, 0] : f32 from vector<1x1x1xf32>
    %99 = vector.shape_cast %85 : vector<8x1xf32> to vector<1x8x1xf32>
    %cst_43 = arith.constant dense<0.000000e+00> : vector<1xf32>
    %100 = vector.multi_reduction <add>, %99, %cst_43 [1, 2] : vector<1x8x1xf32> to vector<1xf32>
    %101 = vector.shape_cast %100 : vector<1xf32> to vector<1x1x1xf32>
    %102 = vector.extract %101[0, 0, 0] : f32 from vector<1x1x1xf32>
    %103 = arith.subf %102, %98 : f32
    %cst_44 = arith.constant 1.250000e-01 : f32
    %104 = arith.mulf %103, %cst_44 : f32
    %105 = vector.shape_cast %94 : vector<1x8xf32> to vector<1x1x8xf32>
    %cst_45 = arith.constant dense<0.000000e+00> : vector<1xf32>
    %106 = vector.multi_reduction <add>, %105, %cst_45 [1, 2] : vector<1x1x8xf32> to vector<1xf32>
    %107 = vector.shape_cast %106 : vector<1xf32> to vector<1x1x1xf32>
    %108 = vector.extract %107[0, 0, 0] : f32 from vector<1x1x1xf32>
    %109 = arith.subf %108, %98 : f32
    %cst_46 = arith.constant 1.250000e-01 : f32
    %110 = arith.mulf %109, %cst_46 : f32
    %111 = arith.addf %104, %110 : f32
    %cst_47 = arith.constant 5.000000e-01 : f32
    %112 = arith.mulf %cst_47, %111 : f32
    %113 = arith.addf %47, %112 : f32
    %114 = vector.extract_strided_slice %43 {offsets = [0, 0], sizes = [1, 1], strides = [1, 1]} : vector<1x2xf32> to vector<1x1xf32>
    %115 = vector.shape_cast %114 : vector<1x1xf32> to vector<1x1x1xf32>
    %cst_48 = arith.constant dense<0.000000e+00> : vector<1xf32>
    %116 = vector.multi_reduction <add>, %115, %cst_48 [1, 2] : vector<1x1x1xf32> to vector<1xf32>
    %117 = vector.shape_cast %116 : vector<1xf32> to vector<1x1x1xf32>
    %118 = vector.extract %117[0, 0, 0] : f32 from vector<1x1x1xf32>
    %c0_49 = arith.constant 0 : index
    %c0_50 = arith.constant 0 : index
    %119 = memref.load %arg11[%c0_49, %c0_50] : memref<1x4xf32, #tpu.memory_space<smem>>
    memref.store %118, %arg11[%c0_49, %c0_50] : memref<1x4xf32, #tpu.memory_space<smem>>
    %120 = vector.extract_strided_slice %43 {offsets = [0, 1], sizes = [1, 1], strides = [1, 1]} : vector<1x2xf32> to vector<1x1xf32>
    %121 = vector.shape_cast %120 : vector<1x1xf32> to vector<1x1x1xf32>
    %cst_51 = arith.constant dense<0.000000e+00> : vector<1xf32>
    %122 = vector.multi_reduction <add>, %121, %cst_51 [1, 2] : vector<1x1x1xf32> to vector<1xf32>
    %123 = vector.shape_cast %122 : vector<1xf32> to vector<1x1x1xf32>
    %124 = vector.extract %123[0, 0, 0] : f32 from vector<1x1x1xf32>
    %c0_52 = arith.constant 0 : index
    %c1 = arith.constant 1 : index
    %125 = memref.load %arg11[%c0_52, %c1] : memref<1x4xf32, #tpu.memory_space<smem>>
    memref.store %124, %arg11[%c0_52, %c1] : memref<1x4xf32, #tpu.memory_space<smem>>
    %c0_53 = arith.constant 0 : index
    %c2 = arith.constant 2 : index
    %126 = memref.load %arg11[%c0_53, %c2] : memref<1x4xf32, #tpu.memory_space<smem>>
    memref.store %111, %arg11[%c0_53, %c2] : memref<1x4xf32, #tpu.memory_space<smem>>
    %c0_54 = arith.constant 0 : index
    %c3 = arith.constant 3 : index
    %127 = memref.load %arg11[%c0_54, %c3] : memref<1x4xf32, #tpu.memory_space<smem>>
    memref.store %113, %arg11[%c0_54, %c3] : memref<1x4xf32, #tpu.memory_space<smem>>
    return
  }
}

</mosaic_0001>

<llo_original>
// kernel: _forward_contrastive.1
$region0: #{_forward_contrastive.1}
  #allocation0 [shape = 'u32[]', space=smem, size = 0x4, offset = 0x4, fixed_abs, tag = 'smem constant byte address 0x4 - core index']
  #allocation1 [shape = 'u32[144,128]{1,0:T(1,128)}', space=vmem, size = 0x12000, scoped, tag = 'internal scratch']
  #allocation2 [shape = 'f32[1]{0:T(128)S(6)}', space=smem, size = 0x200, scoped, tag = 'scoped memory for _forward_contrastive.1']
  %s0 = inlined_call_operand.vmem [shape: s32[8,2], index: 0, kind: input, shape index: {}]
  %s1 = inlined_call_operand.vmem [shape: f32[8,32], index: 1, kind: input, shape index: {}]
  %s2 = inlined_call_operand.hbm [shape: f32[32,16], index: 2, kind: input, shape index: {}]
  %s3 = inlined_call_operand.vmem [shape: f32[1,16], index: 3, kind: input, shape index: {}]
  %s4 = inlined_call_operand.vmem [shape: f32[16,2], index: 4, kind: input, shape index: {}]
  %s5 = inlined_call_operand.vmem [shape: f32[2,16], index: 5, kind: input, shape index: {}]
  %s6 = inlined_call_operand.vmem [shape: f32[1,16], index: 6, kind: input, shape index: {}]
  %s7 = inlined_call_operand.vmem [shape: f32[32,32], index: 7, kind: input, shape index: {}]
  %s8 = inlined_call_operand.vmem [shape: f32[1,32], index: 8, kind: input, shape index: {}]
  %s9 = inlined_call_operand.vmem [shape: f32[8,32], index: 9, kind: input, shape index: {}]
  %s10 = inlined_call_operand.<no memory space> [shape: f32[1], index: 10, kind: input, shape index: {}]
  %s11 = inlined_call_operand.hbm [shape: f32[1,4], index: 11, kind: output, shape index: {}]
  %s12 = sld [smem:[#allocation0]]
  $region58: #{_forward_contrastive.1} parent=0
    _
  %s14 = ssub.s32 1, %s12
  %s15 = scalar_select 0, %s14, %s12
  %16 = sst [smem:[#allocation2]] %s10
  $region1: #{_forward_contrastive.1} parent=0
    #allocation3 [shape = 'u8[16384]{0}', space=vmem, size = 0x4000, scoped, tag = 'input window, operand 2, single buffered']
    #allocation4 [shape = 's32[1]{0}', space=sflag, size = 0x4, scoped, tag = 'scoped memory for _forward_contrastive.1']
    #allocation5 [shape = 's32[1]{0}', space=sflag, size = 0x4, scoped, tag = 'scoped memory for _forward_contrastive.1']
    #allocation6 [shape = 'u8[512]{0}', space=smem, size = 0x200, scoped, tag = 'output window, operand 0, single buffered']
    %17 = vsyncpa [#allocation4], 0
    %18 = vsyncpa [#allocation5], 0
    // Predicated region
    $region2: #{_forward_contrastive.1} parent=1 // pred_check
      _
    $region3: #{_forward_contrastive.1} parent=1 // pred_check_branch
      %20 = sbr.rel (0) target = $region5
    $region4: #{_forward_contrastive.1} parent=1 // pred_region
      _
    $region5: #{_forward_contrastive.1} parent=1 // pred_fallthru
      _
    // Predicated region
    $region6: #{_forward_contrastive.1} parent=1 // pred_check
      _
    $region7: #{_forward_contrastive.1} parent=1 // pred_check_branch
      %22 = sbr.rel (0) target = $region9
    $region8: #{_forward_contrastive.1} parent=1 // pred_region
      _
    $region9: #{_forward_contrastive.1} parent=1 // pred_fallthru
      _
    // Predicated region
    $region10: #{_forward_contrastive.1} parent=1 // pred_check
      _
    $region11: #{_forward_contrastive.1} parent=1 // pred_check_branch
      %24 = sbr.rel (0) target = $region13
    $region12: #{_forward_contrastive.1} parent=1 // pred_region
      %s26 = ssub.s32 512, 512
      %27 = vsyncadd [#allocation4], %s26
      %s28 = sshll.u32 [#allocation3], 4
      %s29 = int_to_ptr.vmem [resolvable:$true] %s28
      %34 = dma.hbm_to_vmem [thread:$0]  %s2, 512, %s29, [#allocation4], 128, 128, 8
    $region13: #{_forward_contrastive.1} parent=1 // pred_fallthru
      _
    // Predicated region
    $region14: #{_forward_contrastive.1} parent=1 // pred_check
      _
    $region15: #{_forward_contrastive.1} parent=1 // pred_check_branch
      %36 = sbr.rel (0) target = $region17
    $region16: #{_forward_contrastive.1} parent=1 // pred_region
      _
    $region17: #{_forward_contrastive.1} parent=1 // pred_fallthru
      _
    // Predicated region
    $region18: #{_forward_contrastive.1} parent=1 // pred_check
      _
    $region19: #{_forward_contrastive.1} parent=1 // pred_check_branch
      %38 = sbr.rel (0) target = $region21
    $region20: #{_forward_contrastive.1} parent=1 // pred_region
      _
    $region21: #{_forward_contrastive.1} parent=1 // pred_fallthru
      _
    // Predicated region
    $region22: #{_forward_contrastive.1} parent=1 // pred_check
      _
    $region23: #{_forward_contrastive.1} parent=1 // pred_check_branch
      %40 = sbr.rel (0) target = $region25
    $region24: #{_forward_contrastive.1} parent=1 // pred_region
      _
    $region25: #{_forward_contrastive.1} parent=1 // pred_fallthru
      _
    // Predicated region
    $region26: #{_forward_contrastive.1} parent=1 // pred_check
      _
    $region27: #{_forward_contrastive.1} parent=1 // pred_check_branch
      %42 = sbr.rel (0) target = $region29
    $region28: #{_forward_contrastive.1} parent=1 // pred_region
      _
    $region29: #{_forward_contrastive.1} parent=1 // pred_fallthru
      _
    // Predicated region
    $region30: #{_forward_contrastive.1} parent=1 // pred_check
      _
    $region31: #{_forward_contrastive.1} parent=1 // pred_check_branch
      %44 = sbr.rel (0) target = $region33
    $region32: #{_forward_contrastive.1} parent=1 // pred_region
      _
    $region33: #{_forward_contrastive.1} parent=1 // pred_fallthru
      _
    // Predicated region
    $region34: #{_forward_contrastive.1} parent=1 // pred_check
      _
    $region35: #{_forward_contrastive.1} parent=1 // pred_check_branch
      %46 = sbr.rel (0) target = $region37
    $region36: #{_forward_contrastive.1} parent=1 // pred_region
      _
    $region37: #{_forward_contrastive.1} parent=1 // pred_fallthru
      _
    // Predicated region
    $region38: #{_forward_contrastive.1} parent=1 // pred_check
      _
    $region39: #{_forward_contrastive.1} parent=1 // pred_check_branch
      %48 = sbr.rel (0) target = $region41
    $region40: #{_forward_contrastive.1} parent=1 // pred_region
      _
    $region41: #{_forward_contrastive.1} parent=1 // pred_fallthru
      _
    // Predicated region
    $region42: #{_forward_contrastive.1} parent=1 // pred_check
      _
    $region43: #{_forward_contrastive.1} parent=1 // pred_check_branch
      %50 = sbr.rel (0) target = $region45
    $region44: #{_forward_contrastive.1} parent=1 // pred_region
      _
    $region45: #{_forward_contrastive.1} parent=1 // pred_fallthru
      _
    // Predicated region
    $region46: #{_forward_contrastive.1} parent=1 // pred_check
      _
    $region47: #{_forward_contrastive.1} parent=1 // pred_check_branch
      %52 = sbr.rel (0) target = $region49
    $region48: #{_forward_contrastive.1} parent=1 // pred_region
      %53 = dma.done [#allocation4], 512
    $region49: #{_forward_contrastive.1} parent=1 // pred_fallthru
      _
    %v54 = vld [vmem:[%s1] sm:$0xff]
    %v55 = vld [vmem:[%s0] sm:$0xff]
    %v56 = vld [vmem:[#allocation3] sm:$0xff]
    %v57 = vld [vmem:[#allocation3 + $0x8] sm:$0xff]
    %v58 = vld [vmem:[#allocation3 + $0x10] sm:$0xff]
    %v59 = vld [vmem:[#allocation3 + $0x18] sm:$0xff]
    %v60 = vld [vmem:[%s3] sm:$0x1]
    %v62 = vlaneseq
    %v63 = vshrl.u32 %v62, 7
    %v64 = vsub.s32 0, %v63
    %v65 = vrot.slane %v60, %v64
    %vm67 = vcmask 261120
    %v69 = vsel %vm67, %v54, 0
    %71 = vmatprep.subr.mxu0 0.0
    %72 = vmatpush1.msra.mxu0 0.0
    %73 = vmatprep.subr.mxu0 0.0
    %74 = vmatpush1.msra.mxu0 0.0
    %75 = vmatprep.subr.mxu0 0.0
    %76 = vmatpush1.msra.mxu0 0.0
    %77 = vmatprep.subr.mxu0 0.0
    %78 = vmatpush1.msra.mxu0 0.0
    %79 = vmatprep.subr.mxu0 0.0
    %80 = vmatpush1.msra.mxu0 0.0
    %81 = vmatprep.subr.mxu0 0.0
    %82 = vmatpush1.msra.mxu0 0.0
    %83 = vmatprep.subr.mxu0 0.0
    %84 = vmatpush1.msra.mxu0 0.0
    %85 = vmatprep.subr.mxu0 0.0
    %86 = vmatpush1.msra.mxu0 0.0
    %87 = vmatprep.subr.mxu0 0.0
    %88 = vmatpush1.msra.mxu0 0.0
    %89 = vmatprep.subr.mxu0 0.0
    %90 = vmatpush1.msra.mxu0 0.0
    %91 = vmatprep.subr.mxu0 0.0
    %92 = vmatpush1.msra.mxu0 0.0
    %93 = vmatprep.subr.mxu0 0.0
    %94 = vmatpush1.msra.mxu0 0.0
    %95 = vmatprep.subr.mxu0 0.0
    %96 = vmatpush1.msra.mxu0 %v59
    %97 = vmatprep.subr.mxu0 0.0
    %98 = vmatpush1.msra.mxu0 %v58
    %99 = vmatprep.subr.mxu0 0.0
    %100 = vmatpush1.msra.mxu0 %v57
    %101 = vmatprep.subr.mxu0 0.0
    %102 = vmatpush1.msra.mxu0 %v56
    %103 = vmatprep.subr.mxu0 0.0
    %104 = vmatpush2.msra.mxu0 0.0
    %105 = vmatprep.subr.mxu0 0.0
    %106 = vmatpush2.msra.mxu0 0.0
    %107 = vmatprep.subr.mxu0 0.0
    %108 = vmatpush2.msra.mxu0 0.0
    %109 = vmatprep.subr.mxu0 0.0
    %110 = vmatpush2.msra.mxu0 0.0
    %111 = vmatprep.subr.mxu0 0.0
    %112 = vmatpush2.msra.mxu0 0.0
    %113 = vmatprep.subr.mxu0 0.0
    %114 = vmatpush2.msra.mxu0 0.0
    %115 = vmatprep.subr.mxu0 0.0
    %116 = vmatpush2.msra.mxu0 0.0
    %117 = vmatprep.subr.mxu0 0.0
    %118 = vmatpush2.msra.mxu0 0.0
    %119 = vmatprep.subr.mxu0 0.0
    %120 = vmatpush2.msra.mxu0 0.0
    %121 = vmatprep.subr.mxu0 0.0
    %122 = vmatpush2.msra.mxu0 0.0
    %123 = vmatprep.subr.mxu0 0.0
    %124 = vmatpush2.msra.mxu0 0.0
    %125 = vmatprep.subr.mxu0 0.0
    %126 = vmatpush2.msra.mxu0 0.0
    %127 = vmatprep.subr.mxu0 0.0
    %128 = vmatpush2.msra.mxu0 0.0
    %129 = vmatprep.subr.mxu0 0.0
    %130 = vmatpush2.msra.mxu0 0.0
    %131 = vmatprep.subr.mxu0 0.0
    %132 = vmatpush2.msra.mxu0 0.0
    %133 = vmatprep.subr.mxu0 0.0
    %134 = vmatpush2.msra.mxu0 0.0
    %135 = vmatprep.mubr.f32.mxu0 0.0
    %136 = vmatmul.mubr.f32.gmra.mxu0 %v69
    %v137 = vpop.f32.mrf.mxu0
    %v138 = vadd.f32 %v65, %v137
    %v139 = vpop.f32.mrf.mxu0
    %140 = vdwg.mxu0
    %v141 = vcvt.s32.f32 %v55
    %v142 = vld [vmem:[%s5] sm:$0x3]
    %vm143 = vcmask 15360
    %v145 = vsel %vm143, %v141, 0
    %vm147 = vcmask 1041408
    %v149 = vsel %vm147, %v142, 0
    %151 = vmatprep.subr.mxu0 0.0
    %152 = vmatpush1.msra.mxu0 0.0
    %153 = vmatprep.subr.mxu0 0.0
    %154 = vmatpush1.msra.mxu0 0.0
    %155 = vmatprep.subr.mxu0 0.0
    %156 = vmatpush1.msra.mxu0 0.0
    %157 = vmatprep.subr.mxu0 0.0
    %158 = vmatpush1.msra.mxu0 0.0
    %159 = vmatprep.subr.mxu0 0.0
    %160 = vmatpush1.msra.mxu0 0.0
    %161 = vmatprep.subr.mxu0 0.0
    %162 = vmatpush1.msra.mxu0 0.0
    %163 = vmatprep.subr.mxu0 0.0
    %164 = vmatpush1.msra.mxu0 0.0
    %165 = vmatprep.subr.mxu0 0.0
    %166 = vmatpush1.msra.mxu0 0.0
    %167 = vmatprep.subr.mxu0 0.0
    %168 = vmatpush1.msra.mxu0 0.0
    %169 = vmatprep.subr.mxu0 0.0
    %170 = vmatpush1.msra.mxu0 0.0
    %171 = vmatprep.subr.mxu0 0.0
    %172 = vmatpush1.msra.mxu0 0.0
    %173 = vmatprep.subr.mxu0 0.0
    %174 = vmatpush1.msra.mxu0 0.0
    %175 = vmatprep.subr.mxu0 0.0
    %176 = vmatpush1.msra.mxu0 0.0
    %177 = vmatprep.subr.mxu0 0.0
    %178 = vmatpush1.msra.mxu0 0.0
    %179 = vmatprep.subr.mxu0 0.0
    %180 = vmatpush1.msra.mxu0 0.0
    %181 = vmatprep.subr.mxu0 0.0
    %182 = vmatpush1.msra.mxu0 %v149
    %183 = vmatprep.subr.mxu0 0.0
    %184 = vmatpush2.msra.mxu0 0.0
    %185 = vmatprep.subr.mxu0 0.0
    %186 = vmatpush2.msra.mxu0 0.0
    %187 = vmatprep.subr.mxu0 0.0
    %188 = vmatpush2.msra.mxu0 0.0
    %189 = vmatprep.subr.mxu0 0.0
    %190 = vmatpush2.msra.mxu0 0.0
    %191 = vmatprep.subr.mxu0 0.0
    %192 = vmatpush2.msra.mxu0 0.0
    %193 = vmatprep.subr.mxu0 0.0
    %194 = vmatpush2.msra.mxu0 0.0
    %195 = vmatprep.subr.mxu0 0.0
    %196 = vmatpush2.msra.mxu0 0.0
    %197 = vmatprep.subr.mxu0 0.0
    %198 = vmatpush2.msra.mxu0 0.0
    %199 = vmatprep.subr.mxu0 0.0
    %200 = vmatpush2.msra.mxu0 0.0
    %201 = vmatprep.subr.mxu0 0.0
    %202 = vmatpush2.msra.mxu0 0.0
    %203 = vmatprep.subr.mxu0 0.0
    %204 = vmatpush2.msra.mxu0 0.0
    %205 = vmatprep.subr.mxu0 0.0
    %206 = vmatpush2.msra.mxu0 0.0
    %207 = vmatprep.subr.mxu0 0.0
    %208 = vmatpush2.msra.mxu0 0.0
    %209 = vmatprep.subr.mxu0 0.0
    %210 = vmatpush2.msra.mxu0 0.0
    %211 = vmatprep.subr.mxu0 0.0
    %212 = vmatpush2.msra.mxu0 0.0
    %213 = vmatprep.subr.mxu0 0.0
    %214 = vmatpush2.msra.mxu0 0.0
    %215 = vmatprep.mubr.f32.mxu0 0.0
    %216 = vmatmul.mubr.f32.gmra.mxu0 %v145
    %v217 = vpop.f32.mrf.mxu0
    %v218 = vadd.f32 0.0, %v217
    %v219 = vpop.f32.mrf.mxu0
    %220 = vdwg.mxu0
    %v221 = vld [vmem:[%s6] sm:$0x1]
    %v223 = vlaneseq
    %v224 = vshrl.u32 %v223, 7
    %v225 = vsub.s32 0, %v224
    %v226 = vrot.slane %v221, %v225
    %vm228 = vcmp.eq.f32.partialorder %v226, %v218
    %vm229 = vcmask 130048
    %v230 = vsel %vm229, %v138, -inf
    %231 = vmax.xlane.f32.xlu0 %v230
    %v232 = vpop.xlane.xlu0 %231
    %v233 = vsub.f32 %v138, %v232
    %v234 = vmul.f32 %v233, 1.442695
    %v235 = vpow.pop %v234
    %v236 = vld [vmem:[%s4] sm:$0xff]
    %v237 = vld [vmem:[%s4 + $0x8] sm:$0xff]
    %v239 = vsel %vm229, %v235, 0
    %241 = vmatprep.subr.mxu0 0.0
    %242 = vmatpush1.msra.mxu0 0.0
    %243 = vmatprep.subr.mxu0 0.0
    %244 = vmatpush1.msra.mxu0 0.0
    %245 = vmatprep.subr.mxu0 0.0
    %246 = vmatpush1.msra.mxu0 0.0
    %247 = vmatprep.subr.mxu0 0.0
    %248 = vmatpush1.msra.mxu0 0.0
    %249 = vmatprep.subr.mxu0 0.0
    %250 = vmatpush1.msra.mxu0 0.0
    %251 = vmatprep.subr.mxu0 0.0
    %252 = vmatpush1.msra.mxu0 0.0
    %253 = vmatprep.subr.mxu0 0.0
    %254 = vmatpush1.msra.mxu0 0.0
    %255 = vmatprep.subr.mxu0 0.0
    %256 = vmatpush1.msra.mxu0 0.0
    %257 = vmatprep.subr.mxu0 0.0
    %258 = vmatpush1.msra.mxu0 0.0
    %259 = vmatprep.subr.mxu0 0.0
    %260 = vmatpush1.msra.mxu0 0.0
    %261 = vmatprep.subr.mxu0 0.0
    %262 = vmatpush1.msra.mxu0 0.0
    %263 = vmatprep.subr.mxu0 0.0
    %264 = vmatpush1.msra.mxu0 0.0
    %265 = vmatprep.subr.mxu0 0.0
    %266 = vmatpush1.msra.mxu0 0.0
    %267 = vmatprep.subr.mxu0 0.0
    %268 = vmatpush1.msra.mxu0 0.0
    %269 = vmatprep.subr.mxu0 0.0
    %270 = vmatpush1.msra.mxu0 %v237
    %271 = vmatprep.subr.mxu0 0.0
    %272 = vmatpush1.msra.mxu0 %v236
    %273 = vmatprep.subr.mxu0 0.0
    %274 = vmatpush2.msra.mxu0 0.0
    %275 = vmatprep.subr.mxu0 0.0
    %276 = vmatpush2.msra.mxu0 0.0
    %277 = vmatprep.subr.mxu0 0.0
    %278 = vmatpush2.msra.mxu0 0.0
    %279 = vmatprep.subr.mxu0 0.0
    %280 = vmatpush2.msra.mxu0 0.0
    %281 = vmatprep.subr.mxu0 0.0
    %282 = vmatpush2.msra.mxu0 0.0
    %283 = vmatprep.subr.mxu0 0.0
    %284 = vmatpush2.msra.mxu0 0.0
    %285 = vmatprep.subr.mxu0 0.0
    %286 = vmatpush2.msra.mxu0 0.0
    %287 = vmatprep.subr.mxu0 0.0
    %288 = vmatpush2.msra.mxu0 0.0
    %289 = vmatprep.subr.mxu0 0.0
    %290 = vmatpush2.msra.mxu0 0.0
    %291 = vmatprep.subr.mxu0 0.0
    %292 = vmatpush2.msra.mxu0 0.0
    %293 = vmatprep.subr.mxu0 0.0
    %294 = vmatpush2.msra.mxu0 0.0
    %295 = vmatprep.subr.mxu0 0.0
    %296 = vmatpush2.msra.mxu0 0.0
    %297 = vmatprep.subr.mxu0 0.0
    %298 = vmatpush2.msra.mxu0 0.0
    %299 = vmatprep.subr.mxu0 0.0
    %300 = vmatpush2.msra.mxu0 0.0
    %301 = vmatprep.subr.mxu0 0.0
    %302 = vmatpush2.msra.mxu0 0.0
    %303 = vmatprep.subr.mxu0 0.0
    %304 = vmatpush2.msra.mxu0 0.0
    %305 = vmatprep.mubr.f32.mxu0 0.0
    %306 = vmatmul.mubr.f32.gmra.mxu0 %v239
    %v307 = vpop.f32.mrf.mxu0
    %v308 = vadd.f32 0.0, %v307
    %v309 = vpop.f32.mrf.mxu0
    %310 = vdwg.mxu0
    %v311 = vlog2.pop %v308
    %v312 = vmul.f32 %v311, 0.6931472
    %v313 = vadd.f32 %v232, %v312
    %v314 = vsel %vm228, %v138, 0.0
    %v316 = vsel %vm229, %v314, 0
    %318 = vmatprep.subr.mxu0 0.0
    %319 = vmatpush1.msra.mxu0 0.0
    %320 = vmatprep.subr.mxu0 0.0
    %321 = vmatpush1.msra.mxu0 0.0
    %322 = vmatprep.subr.mxu0 0.0
    %323 = vmatpush1.msra.mxu0 0.0
    %324 = vmatprep.subr.mxu0 0.0
    %325 = vmatpush1.msra.mxu0 0.0
    %326 = vmatprep.subr.mxu0 0.0
    %327 = vmatpush1.msra.mxu0 0.0
    %328 = vmatprep.subr.mxu0 0.0
    %329 = vmatpush1.msra.mxu0 0.0
    %330 = vmatprep.subr.mxu0 0.0
    %331 = vmatpush1.msra.mxu0 0.0
    %332 = vmatprep.subr.mxu0 0.0
    %333 = vmatpush1.msra.mxu0 0.0
    %334 = vmatprep.subr.mxu0 0.0
    %335 = vmatpush1.msra.mxu0 0.0
    %336 = vmatprep.subr.mxu0 0.0
    %337 = vmatpush1.msra.mxu0 0.0
    %338 = vmatprep.subr.mxu0 0.0
    %339 = vmatpush1.msra.mxu0 0.0
    %340 = vmatprep.subr.mxu0 0.0
    %341 = vmatpush1.msra.mxu0 0.0
    %342 = vmatprep.subr.mxu0 0.0
    %343 = vmatpush1.msra.mxu0 0.0
    %344 = vmatprep.subr.mxu0 0.0
    %345 = vmatpush1.msra.mxu0 0.0
    %346 = vmatprep.subr.mxu0 0.0
    %347 = vmatpush1.msra.mxu0 %v237
    %348 = vmatprep.subr.mxu0 0.0
    %349 = vmatpush1.msra.mxu0 %v236
    %350 = vmatprep.subr.mxu0 0.0
    %351 = vmatpush2.msra.mxu0 0.0
    %352 = vmatprep.subr.mxu0 0.0
    %353 = vmatpush2.msra.mxu0 0.0
    %354 = vmatprep.subr.mxu0 0.0
    %355 = vmatpush2.msra.mxu0 0.0
    %356 = vmatprep.subr.mxu0 0.0
    %357 = vmatpush2.msra.mxu0 0.0
    %358 = vmatprep.subr.mxu0 0.0
    %359 = vmatpush2.msra.mxu0 0.0
    %360 = vmatprep.subr.mxu0 0.0
    %361 = vmatpush2.msra.mxu0 0.0
    %362 = vmatprep.subr.mxu0 0.0
    %363 = vmatpush2.msra.mxu0 0.0
    %364 = vmatprep.subr.mxu0 0.0
    %365 = vmatpush2.msra.mxu0 0.0
    %366 = vmatprep.subr.mxu0 0.0
    %367 = vmatpush2.msra.mxu0 0.0
    %368 = vmatprep.subr.mxu0 0.0
    %369 = vmatpush2.msra.mxu0 0.0
    %370 = vmatprep.subr.mxu0 0.0
    %371 = vmatpush2.msra.mxu0 0.0
    %372 = vmatprep.subr.mxu0 0.0
    %373 = vmatpush2.msra.mxu0 0.0
    %374 = vmatprep.subr.mxu0 0.0
    %375 = vmatpush2.msra.mxu0 0.0
    %376 = vmatprep.subr.mxu0 0.0
    %377 = vmatpush2.msra.mxu0 0.0
    %378 = vmatprep.subr.mxu0 0.0
    %379 = vmatpush2.msra.mxu0 0.0
    %380 = vmatprep.subr.mxu0 0.0
    %381 = vmatpush2.msra.mxu0 0.0
    %382 = vmatprep.mubr.f32.mxu0 0.0
    %383 = vmatmul.mubr.f32.gmra.mxu0 %v316
    %v384 = vpop.f32.mrf.mxu0
    %v385 = vadd.f32 0.0, %v384
    %v386 = vpop.f32.mrf.mxu0
    %387 = vdwg.mxu0
    %vm388 = vcmp.ne.s32.totalorder %v55, 8
    %v389 = vsel %vm388, 1, 0
    %v390 = vcvt.s32.f32 %v389
    %v391 = vsub.f32 %v313, %v385
    %v392 = vsel %vm388, %v391, 0.0
    %v393 = vsel %vm143, %v392, 0.0
    %v394 = vrot.slane %v393, 4
    %v395 = vadd.f32 %v393, %v394
    %v396 = vrot.slane %v395, 2
    %v397 = vadd.f32 %v395, %v396
    %v398 = vrot.slane %v397, 1
    %v399 = vadd.f32 %v397, %v398
    %v400 = vsel %vm143, %v390, 0.0
    %v401 = vrot.slane %v400, 4
    %v402 = vadd.f32 %v400, %v401
    %v403 = vrot.slane %v402, 2
    %v404 = vadd.f32 %v402, %v403
    %v405 = vrot.slane %v404, 1
    %v406 = vadd.f32 %v404, %v405
    %vm407 = vcmp.gt.f32.partialorder %v406, 0.0
    %v408 = vmax.f32 %v406, 1.0
    %v409 = vrcp.pop %v408
    %v410 = vmul.f32 %v399, %v409
    %v411 = vsel %vm407, %v410, 0.0
    %vm412 = vcmask 8192
    %v413 = vsel %vm412, %v411, 0.0
    %414 = vadd.xlane.f32.xlu0 %v413
    %v415 = vpop.xlane.xlu0 %414
    %v416 = vrot.slane %v415, 4
    %v417 = vadd.f32 %v415, %v416
    %v418 = vrot.slane %v417, 2
    %v419 = vadd.f32 %v417, %v418
    %v420 = vrot.slane %v419, 1
    %v421 = vadd.f32 %v419, %v420
    %s422 = vtos %v421
    %v423 = vld [vmem:[%s7] sm:$0xff]
    %v424 = vld [vmem:[%s7 + $0x8] sm:$0xff]
    %v425 = vld [vmem:[%s7 + $0x10] sm:$0xff]
    %v426 = vld [vmem:[%s7 + $0x18] sm:$0xff]
    %v427 = vld [vmem:[%s8] sm:$0x1]
    %v429 = vlaneseq
    %v430 = vshrl.u32 %v429, 7
    %v431 = vsub.s32 0, %v430
    %v432 = vrot.slane %v427, %v431
    %434 = vmatprep.subr.mxu0 0.0
    %435 = vmatpush1.msra.mxu0 0.0
    %436 = vmatprep.subr.mxu0 0.0
    %437 = vmatpush1.msra.mxu0 0.0
    %438 = vmatprep.subr.mxu0 0.0
    %439 = vmatpush1.msra.mxu0 0.0
    %440 = vmatprep.subr.mxu0 0.0
    %441 = vmatpush1.msra.mxu0 0.0
    %442 = vmatprep.subr.mxu0 0.0
    %443 = vmatpush1.msra.mxu0 0.0
    %444 = vmatprep.subr.mxu0 0.0
    %445 = vmatpush1.msra.mxu0 0.0
    %446 = vmatprep.subr.mxu0 0.0
    %447 = vmatpush1.msra.mxu0 0.0
    %448 = vmatprep.subr.mxu0 0.0
    %449 = vmatpush1.msra.mxu0 0.0
    %450 = vmatprep.subr.mxu0 0.0
    %451 = vmatpush1.msra.mxu0 0.0
    %452 = vmatprep.subr.mxu0 0.0
    %453 = vmatpush1.msra.mxu0 0.0
    %454 = vmatprep.subr.mxu0 0.0
    %455 = vmatpush1.msra.mxu0 0.0
    %456 = vmatprep.subr.mxu0 0.0
    %457 = vmatpush1.msra.mxu0 0.0
    %458 = vmatprep.subr.mxu0 0.0
    %459 = vmatpush1.msra.mxu0 %v426
    %460 = vmatprep.subr.mxu0 0.0
    %461 = vmatpush1.msra.mxu0 %v425
    %462 = vmatprep.subr.mxu0 0.0
    %463 = vmatpush1.msra.mxu0 %v424
    %464 = vmatprep.subr.mxu0 0.0
    %465 = vmatpush1.msra.mxu0 %v423
    %466 = vmatprep.subr.mxu0 0.0
    %467 = vmatpush2.msra.mxu0 0.0
    %468 = vmatprep.subr.mxu0 0.0
    %469 = vmatpush2.msra.mxu0 0.0
    %470 = vmatprep.subr.mxu0 0.0
    %471 = vmatpush2.msra.mxu0 0.0
    %472 = vmatprep.subr.mxu0 0.0
    %473 = vmatpush2.msra.mxu0 0.0
    %474 = vmatprep.subr.mxu0 0.0
    %475 = vmatpush2.msra.mxu0 0.0
    %476 = vmatprep.subr.mxu0 0.0
    %477 = vmatpush2.msra.mxu0 0.0
    %478 = vmatprep.subr.mxu0 0.0
    %479 = vmatpush2.msra.mxu0 0.0
    %480 = vmatprep.subr.mxu0 0.0
    %481 = vmatpush2.msra.mxu0 0.0
    %482 = vmatprep.subr.mxu0 0.0
    %483 = vmatpush2.msra.mxu0 0.0
    %484 = vmatprep.subr.mxu0 0.0
    %485 = vmatpush2.msra.mxu0 0.0
    %486 = vmatprep.subr.mxu0 0.0
    %487 = vmatpush2.msra.mxu0 0.0
    %488 = vmatprep.subr.mxu0 0.0
    %489 = vmatpush2.msra.mxu0 0.0
    %490 = vmatprep.subr.mxu0 0.0
    %491 = vmatpush2.msra.mxu0 0.0
    %492 = vmatprep.subr.mxu0 0.0
    %493 = vmatpush2.msra.mxu0 0.0
    %494 = vmatprep.subr.mxu0 0.0
    %495 = vmatpush2.msra.mxu0 0.0
    %496 = vmatprep.subr.mxu0 0.0
    %497 = vmatpush2.msra.mxu0 0.0
    %498 = vmatprep.mubr.f32.mxu0 0.0
    %499 = vmatmul.mubr.f32.gmra.mxu0 %v69
    %v500 = vpop.f32.mrf.mxu0
    %v501 = vadd.f32 %v432, %v500
    %v502 = vpop.f32.mrf.mxu0
    %503 = vdwg.mxu0
    %v504 = vld [vmem:[%s9] sm:$0xff]
    %v505 = vmul.f32 %v501, %v501
    %v506 = vsel %vm67, %v505, 0.0
    %507 = vadd.xlane.f32.xlu0 %v506
    %v508 = vpop.xlane.xlu0 %507
    %v509 = vrsqrt.pop %v508
    %v510 = vmul.f32 %v501, %v509
    %v511 = vmul.f32 %v504, %v504
    %v512 = vsel %vm67, %v511, 0.0
    %513 = vadd.xlane.f32.xlu0 %v512
    %v514 = vpop.xlane.xlu0 %513
    %v515 = vrsqrt.pop %v514
    %v516 = vmul.f32 %v504, %v515
    %v518 = vsel %vm67, %v510, 0
    %v521 = vsel %vm67, %v516, 0
    %523 = vmatprep.subr.mxu0 0.0
    %524 = vmatpush1.xpose.msra.mxu0 0.0
    %525 = vmatprep.subr.mxu0 0.0
    %526 = vmatpush1.xpose.msra.mxu0 0.0
    %527 = vmatprep.subr.mxu0 0.0
    %528 = vmatpush1.xpose.msra.mxu0 0.0
    %529 = vmatprep.subr.mxu0 0.0
    %530 = vmatpush1.xpose.msra.mxu0 0.0
    %531 = vmatprep.subr.mxu0 0.0
    %532 = vmatpush1.xpose.msra.mxu0 0.0
    %533 = vmatprep.subr.mxu0 0.0
    %534 = vmatpush1.xpose.msra.mxu0 0.0
    %535 = vmatprep.subr.mxu0 0.0
    %536 = vmatpush1.xpose.msra.mxu0 0.0
    %537 = vmatprep.subr.mxu0 0.0
    %538 = vmatpush1.xpose.msra.mxu0 0.0
    %539 = vmatprep.subr.mxu0 0.0
    %540 = vmatpush1.xpose.msra.mxu0 0.0
    %541 = vmatprep.subr.mxu0 0.0
    %542 = vmatpush1.xpose.msra.mxu0 0.0
    %543 = vmatprep.subr.mxu0 0.0
    %544 = vmatpush1.xpose.msra.mxu0 0.0
    %545 = vmatprep.subr.mxu0 0.0
    %546 = vmatpush1.xpose.msra.mxu0 0.0
    %547 = vmatprep.subr.mxu0 0.0
    %548 = vmatpush1.xpose.msra.mxu0 0.0
    %549 = vmatprep.subr.mxu0 0.0
    %550 = vmatpush1.xpose.msra.mxu0 0.0
    %551 = vmatprep.subr.mxu0 0.0
    %552 = vmatpush1.xpose.msra.mxu0 0.0
    %553 = vmatprep.subr.mxu0 0.0
    %554 = vmatpush1.xpose.msra.mxu0 %v521
    %555 = vmatprep.subr.mxu0 0.0
    %556 = vmatpush2.xpose.msra.mxu0 0.0
    %557 = vmatprep.subr.mxu0 0.0
    %558 = vmatpush2.xpose.msra.mxu0 0.0
    %559 = vmatprep.subr.mxu0 0.0
    %560 = vmatpush2.xpose.msra.mxu0 0.0
    %561 = vmatprep.subr.mxu0 0.0
    %562 = vmatpush2.xpose.msra.mxu0 0.0
    %563 = vmatprep.subr.mxu0 0.0
    %564 = vmatpush2.xpose.msra.mxu0 0.0
    %565 = vmatprep.subr.mxu0 0.0
    %566 = vmatpush2.xpose.msra.mxu0 0.0
    %567 = vmatprep.subr.mxu0 0.0
    %568 = vmatpush2.xpose.msra.mxu0 0.0
    %569 = vmatprep.subr.mxu0 0.0
    %570 = vmatpush2.xpose.msra.mxu0 0.0
    %571 = vmatprep.subr.mxu0 0.0
    %572 = vmatpush2.xpose.msra.mxu0 0.0
    %573 = vmatprep.subr.mxu0 0.0
    %574 = vmatpush2.xpose.msra.mxu0 0.0
    %575 = vmatprep.subr.mxu0 0.0
    %576 = vmatpush2.xpose.msra.mxu0 0.0
    %577 = vmatprep.subr.mxu0 0.0
    %578 = vmatpush2.xpose.msra.mxu0 0.0
    %579 = vmatprep.subr.mxu0 0.0
    %580 = vmatpush2.xpose.msra.mxu0 0.0
    %581 = vmatprep.subr.mxu0 0.0
    %582 = vmatpush2.xpose.msra.mxu0 0.0
    %583 = vmatprep.subr.mxu0 0.0
    %584 = vmatpush2.xpose.msra.mxu0 0.0
    %585 = vmatprep.subr.mxu0 0.0
    %586 = vmatpush2.xpose.msra.mxu0 0.0
    %587 = vmatprep.mubr.f32.mxu0 0.0
    %588 = vmatmul.mubr.f32.gmra.mxu0 %v518
    %v589 = vpop.f32.mrf.mxu0
    %v590 = vadd.f32 0.0, %v589
    %v591 = vpop.f32.mrf.mxu0
    %592 = vdwg.mxu0
    %s593 = sld [smem:[#allocation2]]
    %v594 = vstv %s593
    %v595 = vmul.f32 %v590, %v594
    %v596 = vlaneseq
    %v597 = vshrl.u32 %v596, 7
    %v598 = vlaneseq
    %v599 = vand.u32 %v598, 127
    %vm600 = vcmp.eq.s32.totalorder %v597, %v599
    %v601 = vsel %vm600, %v595, 0.0
    %vm602 = vcmask 64512
    %v603 = vsel %vm602, %v601, 0.0
    %604 = vadd.xlane.f32.xlu0 %v603
    %v605 = vpop.xlane.xlu0 %604
    %v606 = vsel %vm602, %v595, -inf
    %607 = vmax.xlane.f32.xlu0 %v606
    %v608 = vpop.xlane.xlu0 %607
    %v609 = vsub.f32 %v595, %v608
    %v610 = vmul.f32 %v609, 1.442695
    %v611 = vpow.pop %v610
    %v612 = vsel %vm602, %v611, 0.0
    %613 = vadd.xlane.f32.xlu0 %v612
    %v614 = vpop.xlane.xlu0 %613
    %v615 = vlog2.pop %v614
    %v616 = vmul.f32 %v615, 0.6931472
    %v617 = vadd.f32 %v608, %v616
    %v618 = vrot.slane %v606, 4
    %v619 = vmax.f32 %v606, %v618
    %v620 = vrot.slane %v619, 2
    %v621 = vmax.f32 %v619, %v620
    %v622 = vrot.slane %v621, 1
    %v623 = vmax.f32 %v621, %v622
    %v624 = vsub.f32 %v595, %v623
    %v625 = vmul.f32 %v624, 1.442695
    %v626 = vpow.pop %v625
    %v627 = vsel %vm602, %v626, 0.0
    %v628 = vrot.slane %v627, 4
    %v629 = vadd.f32 %v627, %v628
    %v630 = vrot.slane %v629, 2
    %v631 = vadd.f32 %v629, %v630
    %v632 = vrot.slane %v631, 1
    %v633 = vadd.f32 %v631, %v632
    %v634 = vlog2.pop %v633
    %v635 = vmul.f32 %v634, 0.6931472
    %v636 = vadd.f32 %v623, %v635
    %vm637 = vcmask 7168
    %v638 = vsel %vm637, %v605, 0.0
    %639 = vadd.xlane.f32.xlu0 %v638
    %v640 = vpop.xlane.xlu0 %639
    %v641 = vrot.slane %v640, 4
    %v642 = vadd.f32 %v640, %v641
    %v643 = vrot.slane %v642, 2
    %v644 = vadd.f32 %v642, %v643
    %v645 = vrot.slane %v644, 1
    %v646 = vadd.f32 %v644, %v645
    %s647 = vtos %v646
    %v648 = vsel %vm637, %v617, 0.0
    %649 = vadd.xlane.f32.xlu0 %v648
    %v650 = vpop.xlane.xlu0 %649
    %v651 = vrot.slane %v650, 4
    %v652 = vadd.f32 %v650, %v651
    %v653 = vrot.slane %v652, 2
    %v654 = vadd.f32 %v652, %v653
    %v655 = vrot.slane %v654, 1
    %v656 = vadd.f32 %v654, %v655
    %s657 = vtos %v656
    %s658 = ssub.f32 %s657, %s647
    %s659 = smul.f32 %s658, 0.125
    %vm660 = vcmask 57344
    %v661 = vsel %vm660, %v636, 0.0
    %662 = vadd.xlane.f32.xlu0 %v661
    %v663 = vpop.xlane.xlu0 %662
    %v664 = vrot.slane %v663, 4
    %v665 = vadd.f32 %v663, %v664
    %v666 = vrot.slane %v665, 2
    %v667 = vadd.f32 %v665, %v666
    %v668 = vrot.slane %v667, 1
    %v669 = vadd.f32 %v667, %v668
    %s670 = vtos %v669
    %s671 = ssub.f32 %s670, %s647
    %s672 = smul.f32 %s671, 0.125
    %s673 = sadd.f32 %s659, %s672
    %s674 = smul.f32 %s673, 0.5
    %s675 = sadd.f32 %s422, %s674
    %v676 = vadd.f32 %v411, 0.0
    %s677 = vtos %v676
    %s678 = scalar_lea.smem [#allocation6], 0
    %679 = sst [smem:[%s678]] %s677
    %681 = vrot.lane.b32.xlu0 %v676, 127
    %v682 = vpop.permute.xlu0 %681
    %s684 = vtos %v682
    %s685 = scalar_lea.smem [#allocation6], 1
    %686 = sst [smem:[%s685]] %s684
    %s687 = scalar_lea.smem [#allocation6], 2
    %688 = sst [smem:[%s687]] %s673
    %s689 = scalar_lea.smem [#allocation6], 3
    %690 = sst [smem:[%s689]] %s675
    // Predicated region
    $region50: #{_forward_contrastive.1} parent=1 // pred_check
      _
    $region51: #{_forward_contrastive.1} parent=1 // pred_check_branch
      %692 = sbr.rel (0) target = $region53
    $region52: #{_forward_contrastive.1} parent=1 // pred_region
      %s694 = ssub.s32 16, 16
      %695 = vsyncadd [#allocation5], %s694
      %698 = dma.smem_to_hbm [#allocation6], 16, %s11, [#allocation5]
    $region53: #{_forward_contrastive.1} parent=1 // pred_fallthru
      _
    // Predicated region
    $region54: #{_forward_contrastive.1} parent=1 // pred_check
      _
    $region55: #{_forward_contrastive.1} parent=1 // pred_check_branch
      %700 = sbr.rel (0) target = $region57
    $region56: #{_forward_contrastive.1} parent=1 // pred_region
      %701 = dma.done [#allocation5], 16
    $region57: #{_forward_contrastive.1} parent=1 // pred_fallthru
      _
    %702 = sfence
    %703 = vsyncpa [#allocation4], 1
    %704 = vsyncpa [#allocation5], 1

</llo_original>
